<compile_context>
chip_gen: v7x
topology: tpu7x:2x2x1
jax: 0.10.0
libtpu: 0.0.40
codegen_flags: <defaults>
</compile_context>

<pallas_src>
import functools

import jax
import jax.numpy as jnp
from jax import lax
from jax.experimental import pallas as pl
from jax.experimental.pallas import tpu as pltpu


def _round_up(x, m):
    return ((x + m - 1) // m) * m


def _ensemble_kernel(x_ref, wt_ref, hw_ref, b_ref, feats_ref, logits_ref,
                     acc_ref, *, n_head_layers, chunk):
    """Fused ensemble forward for ONE sample / ONE HW tile.

    Grid: (N, HW_tiles) -- axis 0 "parallel" (megacore), axis 1 "arbitrary".

    x_ref:      (C, T_HW)      this sample's HW tile (HW in lanes)
    wt_ref:     (F_sub, C)     concatenated encoder weights, transposed
                               (F_sub = F_total rounded up to 8, NOT 128)
    hw_ref:     (L, D, D)      zero-padded head weight matrices
    b_ref:      (1+L, D)       row 0: encoder bias; rows 1..L: head biases
    feats_ref:  (1, D)         concatenated features for this sample  (out)
    logits_ref: (1, D)         head output for this sample            (out)
    acc_ref:    (F_sub, 128)   per-sample running elementwise spatial max
    """
    t = pl.program_id(1)

    @pl.when(t == 0)
    def _init():
        acc_ref[...] = jnp.full(acc_ref.shape, -jnp.inf, jnp.float32)

    f_sub = wt_ref.shape[0]
    t_hw = x_ref.shape[-1]
    n_chunks = t_hw // chunk
    wt = wt_ref[...]                                       # (F_sub, C)

    def chunk_body(i, acc):
        start = pl.multiple_of(i * chunk, chunk) if n_chunks > 1 else 0
        x_c = x_ref[:, pl.ds(start, chunk)]                # (C, chunk)
        # 1x1 conv as matmul: (F_sub, C) @ (C, chunk) -> (F_sub, chunk)
        y = jnp.dot(wt, x_c, preferred_element_type=jnp.float32)
        if chunk % 128 == 0:
            # pure-VPU running max, 128 lanes at a time (no per-step XLU work)
            for j in range(chunk // 128):
                acc = jnp.maximum(acc, y[:, j * 128:(j + 1) * 128])
        else:
            # odd / tiny spatial extent: one lane-reduce, broadcast into acc
            acc = jnp.maximum(acc, jnp.max(y, axis=1, keepdims=True))
        return acc

    acc = acc_ref[...]
    if n_chunks == 1:
        acc = chunk_body(0, acc)
    else:
        acc = lax.fori_loop(0, n_chunks, chunk_body, acc, unroll=(n_chunks <= 8))
    acc_ref[...] = acc

    @pl.when(t == pl.num_programs(1) - 1)
    def _finalize():
        d = feats_ref.shape[-1]
        # single cross-lane (XLU) transpose + reduce, once per sample
        acc_t = jnp.transpose(acc_ref[...])                # (128, F_sub)
        fr = jnp.max(acc_t, axis=0, keepdims=True)         # (1, F_sub)
        if d > f_sub:
            fr = jnp.concatenate(
                [fr, jnp.zeros((1, d - f_sub), jnp.float32)], axis=1)
        # bias + ReLU hoisted past the spatial max (exact: bias spatially
        # constant, ReLU monotone): relu(max_s(xW) + b) == max_s(relu(xW + b))
        feats = jnp.maximum(fr + b_ref[0:1, :], 0.0)       # (1, D)
        feats_ref[...] = feats
        # prediction head: head_adn_fn (ReLU, redundant since feats >= 0) + MLP
        h = feats
        for li in range(n_head_layers):
            h = jnp.dot(h, hw_ref[li], preferred_element_type=jnp.float32)
            h = h + b_ref[1 + li:2 + li, :]
            if li < n_head_layers - 1:
                h = jnp.maximum(h, 0.0)
        logits_ref[...] = h


class GenericEnsemblePallas:
    def __init__(self, key, *, c_in=4, n_features=(16, 16),
                 head_structure=(32, 16), n_classes=2, hw_tile_cap=None):
        self.c_in = c_in
        self.n_features = list(n_features)
        self.head_structure = list(head_structure)
        self.n_classes = n_classes
        self.nc = 1 if n_classes == 2 else n_classes
        self.n_features_final = sum(self.n_features)
        self.hw_tile_cap = hw_tile_cap

        # Steady-state feature rows (sublanes) and epilogue/head lane width.
        self.f_sub = _round_up(self.n_features_final, 8)
        self.d_pad = _round_up(max(self.f_sub, *self.head_structure, self.nc), 8)

        # Generation-aware VMEM budgeting (v5e/v6e: 128 MiB, v7x: 64 MiB/TC).
        cap = 64 * 1024 * 1024  # conservative fallback = v7x per-core VMEM
        try:
            cap = int(getattr(pltpu.get_tpu_info(), "vmem_capacity_bytes", cap))
        except Exception:
            pass
        self._vmem_limit = int(min(max(cap - 16 * 2**20, 32 * 2**20), 100 * 2**20))
        self._x_budget = max(4 * 2**20, self._vmem_limit - 8 * 2**20)

        n_keys = 2 * len(self.n_features) + 2 * (len(self.head_structure) + 1)
        keys = jax.random.split(key, n_keys)
        ki = iter(keys)

        # Per-network 1x1-conv encoders: weight (C, F_i), bias (1, F_i).
        self.enc_params = []
        for f in self.n_features:
            w = 0.1 * jax.random.normal(next(ki), (c_in, f), jnp.float32)
            b = 0.1 * jax.random.normal(next(ki), (1, f), jnp.float32)
            self.enc_params.append((w, b))

        # Head MLP: F_total -> head_structure -> nc
        dims = [self.n_features_final] + self.head_structure + [self.nc]
        self.head_params = []
        for d_in, d_out in zip(dims[:-1], dims[1:]):
            w = 0.1 * jax.random.normal(next(ki), (d_in, d_out), jnp.float32)
            b = 0.1 * jax.random.normal(next(ki), (1, d_out), jnp.float32)
            self.head_params.append((w, b))
        self.n_head_layers = len(self.head_params)

        # ---- packed / padded parameters consumed by the fused kernel ----
        f_total = self.n_features_final
        w_all = jnp.concatenate([w for w, _ in self.enc_params], axis=1)  # (C, F_tot)
        b_all = jnp.concatenate([b for _, b in self.enc_params], axis=1)  # (1, F_tot)
        self.w_enc_t = (jnp.zeros((self.f_sub, c_in), jnp.float32)
                        .at[:f_total, :].set(w_all.T))
        l = self.n_head_layers
        hw_pack = jnp.zeros((l, self.d_pad, self.d_pad), jnp.float32)
        b_pack = (jnp.zeros((1 + l, self.d_pad), jnp.float32)
                  .at[0, :f_total].set(b_all[0]))
        for li, (w_, b_) in enumerate(self.head_params):
            hw_pack = hw_pack.at[li, :w_.shape[0], :w_.shape[1]].set(w_)
            b_pack = b_pack.at[1 + li, :b_.shape[1]].set(b_[0])
        self.hw_pack = hw_pack
        self.b_pack = b_pack

        self._forward = jax.jit(self._forward_impl)

    # --------------------------------------------------------------- tiling
    def _pick_tiles(self, hw, c):
        bytes_per_lane = 2 * c * 4              # double-buffered f32 x block
        max_lanes = max(128, self._x_budget // bytes_per_lane)
        if self.hw_tile_cap is not None:
            max_lanes = min(max_lanes, self.hw_tile_cap)
        if hw <= max_lanes:
            t_hw = hw                            # single grid step over HW
        else:
            t_hw = (max_lanes // 128) * 128      # largest mult-of-128 divisor
            while t_hw >= 128 and hw % t_hw != 0:
                t_hw -= 128
            if t_hw < 128:
                # TODO(synk): hw exceeds the VMEM budget and has no
                # multiple-of-128 divisor; partial/masked HW tiles are not
                # implemented, so fall back to a single full-HW block.
                t_hw = hw
        for ch in (1024, 512, 256, 128):         # in-kernel compute chunk
            if t_hw % ch == 0:
                return t_hw, ch
        return t_hw, t_hw

    # ---------------------------------------------------------------- fused
    def _forward_impl(self, x):
        n, c, h, w = x.shape
        hw = h * w
        x3 = x.reshape(n, c, hw)                 # free reshape; no HBM transpose
        t_hw, chunk = self._pick_tiles(hw, c)
        num_t = hw // t_hw
        l = self.n_head_layers
        d = self.d_pad

        dims = [self.n_features_final] + self.head_structure + [self.nc]
        head_flops = sum(2 * a * b for a, b in zip(dims[:-1], dims[1:]))
        cost = pl.CostEstimate(
            flops=int(2 * n * hw * c * self.n_features_final + n * head_flops),
            transcendentals=0,
            bytes_accessed=int(4 * (x3.size + self.w_enc_t.size
                                    + self.hw_pack.size + self.b_pack.size
                                    + 2 * n * d)),
        )
        kernel = functools.partial(_ensemble_kernel,
                                   n_head_layers=l, chunk=chunk)
        feats_p, logits_p = pl.pallas_call(
            kernel,
            grid=(n, num_t),
            in_specs=[
                pl.BlockSpec((None, c, t_hw), lambda b, t: (b, 0, t)),
                pl.BlockSpec((self.f_sub, c), lambda b, t: (0, 0)),
                pl.BlockSpec((l, d, d), lambda b, t: (0, 0, 0)),
                pl.BlockSpec((1 + l, d), lambda b, t: (0, 0)),
            ],
            out_specs=[
                pl.BlockSpec((None, 1, d), lambda b, t: (b, 0, 0)),
                pl.BlockSpec((None, 1, d), lambda b, t: (b, 0, 0)),
            ],
            out_shape=[
                jax.ShapeDtypeStruct((n, 1, d), jnp.float32),
                jax.ShapeDtypeStruct((n, 1, d), jnp.float32),
            ],
            scratch_shapes=[pltpu.VMEM((self.f_sub, 128), jnp.float32)],
            compiler_params=pltpu.CompilerParams(
                dimension_semantics=("parallel", "arbitrary"),
                vmem_limit_bytes=self._vmem_limit,
            ),
            cost_estimate=cost,
        )(x3, self.w_enc_t, self.hw_pack, self.b_pack)
        feats = feats_p.reshape(n, d)[:, :self.n_features_final]
        logits = logits_p.reshape(n, d)[:, :self.nc]
        return feats, logits

    # -------------------------------------------------------------- user API
    def forward(self, X, return_features=False):
        if isinstance(X, (list, tuple)):
            if len(X) > 1 and not all(xi is X[0] for xi in X):
                # TODO(synk): distinct per-network inputs (split_input=True
                # path) are not fused into the single shared-read kernel.
                raise NotImplementedError("per-network distinct inputs not supported")
            X = X[0]
        feats, logits = self._forward(X)
        return feats if return_features else logits

    # ----------------------------------------------- pure-jnp reference impl
    def forward_reference(self, x, return_features=False):
        n, c, h, w = x.shape
        xl = x.reshape(n, c, h * w)
        outs = []
        for wgt, b in self.enc_params:
            y = jnp.einsum("ncs,cf->nsf", xl, wgt) + b[None]   # (n, s, f)
            y = jnp.maximum(y, 0.0)
            outs.append(jnp.max(y, axis=1))                    # (n, f)
        feats = jnp.concatenate(outs, axis=1)
        if return_features:
            return feats
        hdd = jnp.maximum(feats, 0.0)
        for li, (w_, b_) in enumerate(self.head_params):
            hdd = hdd @ w_ + b_
            if li < len(self.head_params) - 1:
                hdd = jnp.maximum(hdd, 0.0)
        return hdd


# -----------------------------------------------------------------------------
if __name__ == "__main__":
    key = jax.random.PRNGKey(0)
    k_param, k_data1, k_data2 = jax.random.split(key, 3)

    model = GenericEnsemblePallas(
        k_param, c_in=4, n_features=(16, 16), head_structure=(32, 16), n_classes=2
    )

    # Single NCHW input, shared across both networks (split_input=False).
    x = jax.random.normal(k_data1, (2, 4, 16, 16), jnp.float32)
    out = jax.block_until_ready(model.forward(x))
    assert out.shape == (2, 1), out.shape
    ref = model.forward_reference(x)
    assert jnp.allclose(out, ref, atol=1e-4, rtol=1e-4), (out, ref)

    feats = jax.block_until_ready(model.forward(x, return_features=True))
    assert feats.shape == (2, 32), feats.shape
    feats_ref = model.forward_reference(x, return_features=True)
    assert jnp.allclose(feats, feats_ref, atol=1e-4, rtol=1e-4)

    # Larger spatial input -> still ONE big VMEM-budgeted HW tile, walked in
    # 1024-lane chunks inside the kernel (fori_loop path).
    x2 = jax.random.normal(k_data2, (2, 4, 64, 64), jnp.float32)
    out2 = jax.block_until_ready(model.forward(x2))
    ref2 = model.forward_reference(x2)
    assert jnp.allclose(out2, ref2, atol=1e-4, rtol=1e-4), (out2, ref2)

    # Force multiple HW grid steps to exercise the running-max accumulator /
    # pl.when init-finalize path (grid axis 1 > 1).
    model_tiled = GenericEnsemblePallas(
        k_param, c_in=4, n_features=(16, 16), head_structure=(32, 16),
        n_classes=2, hw_tile_cap=1024
    )
    out3 = jax.block_until_ready(model_tiled.forward(x2))
    ref3 = model_tiled.forward_reference(x2)
    assert jnp.allclose(out3, ref3, atol=1e-4, rtol=1e-4), (out3, ref3)

    print("KERNEL_OK")
</pallas_src>

<mosaic_0001>
module attributes {stable_mosaic.version = 11 : i64} {
  func.func @_ensemble_kernel(%arg0: i32, %arg1: i32, %arg2: memref<1x4x256xf32, #tpu.memory_space<vmem>>, %arg3: memref<32x4xf32, #tpu.memory_space<vmem>>, %arg4: memref<3x32x32xf32, #tpu.memory_space<vmem>>, %arg5: memref<4x32xf32, #tpu.memory_space<vmem>>, %arg6: memref<1x1x32xf32, #tpu.memory_space<vmem>>, %arg7: memref<1x1x32xf32, #tpu.memory_space<vmem>>, %arg8: memref<32x128xf32, #tpu.memory_space<vmem>>) attributes {dimension_semantics = [#tpu.dimension_semantics<parallel>, #tpu.dimension_semantics<arbitrary>], iteration_bounds = array<i64: 2, 1>, scalar_prefetch = 0 : i64, scratch_operands = 1 : i64, tpu.core_type = #tpu.core_type<tc>, window_params = [{transform_indices = @transform_0, window_bounds = array<i64: 1, 4, 256>}, {pipeline_mode = #tpu.pipeline_mode<synchronous>, transform_indices = @transform_1, window_bounds = array<i64: 32, 4>}, {pipeline_mode = #tpu.pipeline_mode<synchronous>, transform_indices = @transform_2, window_bounds = array<i64: 3, 32, 32>}, {pipeline_mode = #tpu.pipeline_mode<synchronous>, transform_indices = @transform_3, window_bounds = array<i64: 4, 32>}, {transform_indices = @transform_4, window_bounds = array<i64: 1, 1, 32>}, {transform_indices = @transform_5, window_bounds = array<i64: 1, 1, 32>}]} {
    %c0_i32 = arith.constant 0 : i32
    %0 = arith.cmpi eq, %arg1, %c0_i32 : i32
    %1 = arith.extui %0 : i1 to i32
    %c0_i32_0 = arith.constant 0 : i32
    %2 = arith.cmpi ne, %1, %c0_i32_0 : i32
    scf.if %2 {
      %cst_11 = arith.constant 0xFF800000 : f32
      %16 = vector.broadcast %cst_11 : f32 to vector<32x128xf32>
      %c0_12 = arith.constant 0 : index
      %c0_13 = arith.constant 0 : index
      %17 = vector.load %arg8[%c0_12, %c0_13] : memref<32x128xf32, #tpu.memory_space<vmem>>, vector<32x128xf32>
      tpu.vector_store %arg8[%c0_12, %c0_13], %16 {strides = array<i32>} : memref<32x128xf32, #tpu.memory_space<vmem>>, vector<32x128xf32>,
    } else {
    }
    %c0 = arith.constant 0 : index
    %c0_1 = arith.constant 0 : index
    %3 = vector.load %arg3[%c0, %c0_1] : memref<32x4xf32, #tpu.memory_space<vmem>>, vector<32x4xf32>
    %c0_2 = arith.constant 0 : index
    %c0_3 = arith.constant 0 : index
    %4 = vector.load %arg8[%c0_2, %c0_3] : memref<32x128xf32, #tpu.memory_space<vmem>>, vector<32x128xf32>
    %c0_4 = arith.constant 0 : index
    %c0_5 = arith.constant 0 : index
    %c0_6 = arith.constant 0 : index
    %5 = vector.load %arg2[%c0_4, %c0_5, %c0_6] : memref<1x4x256xf32, #tpu.memory_space<vmem>>, vector<1x4x256xf32>
    %6 = vector.shape_cast %5 : vector<1x4x256xf32> to vector<4x256xf32>
    %cst = arith.constant dense<0.000000e+00> : vector<32x256xf32>
    %7 = tpu.matmul %3, %6, %cst {dimension_numbers = #tpu.dot_dimension_numbers<[1], [0], [0], [1], [0, 0, 1, 1], [], []>} : vector<32x4xf32>, vector<4x256xf32>, vector<32x256xf32> -> vector<32x256xf32>
    %8 = vector.extract_strided_slice %7 {offsets = [0, 0], sizes = [32, 128], strides = [1, 1]} : vector<32x256xf32> to vector<32x128xf32>
    %9 = arith.maximumf %4, %8 : vector<32x128xf32>
    %10 = vector.extract_strided_slice %7 {offsets = [0, 128], sizes = [32, 128], strides = [1, 1]} : vector<32x256xf32> to vector<32x128xf32>
    %11 = arith.maximumf %9, %10 : vector<32x128xf32>
    %c0_7 = arith.constant 0 : index
    %c0_8 = arith.constant 0 : index
    %12 = vector.load %arg8[%c0_7, %c0_8] : memref<32x128xf32, #tpu.memory_space<vmem>>, vector<32x128xf32>
    tpu.vector_store %arg8[%c0_7, %c0_8], %11 {strides = array<i32>} : memref<32x128xf32, #tpu.memory_space<vmem>>, vector<32x128xf32>,
    %c0_i32_9 = arith.constant 0 : i32
    %13 = arith.cmpi eq, %arg1, %c0_i32_9 : i32
    %14 = arith.extui %13 : i1 to i32
    %c0_i32_10 = arith.constant 0 : i32
    %15 = arith.cmpi ne, %14, %c0_i32_10 : i32
    scf.if %15 {
      %c0_11 = arith.constant 0 : index
      %c0_12 = arith.constant 0 : index
      %16 = vector.load %arg8[%c0_11, %c0_12] : memref<32x128xf32, #tpu.memory_space<vmem>>, vector<32x128xf32>
      %17 = tpu.transpose %16, [1, 0] : vector<32x128xf32> -> vector<128x32xf32>
      %cst_13 = arith.constant dense<0xFF800000> : vector<32xf32>
      %18 = vector.multi_reduction <maximumf>, %17, %cst_13 [0] : vector<128x32xf32> to vector<32xf32>
      %19 = vector.shape_cast %18 : vector<32xf32> to vector<1x32xf32>
      %c0_14 = arith.constant 0 : index
      %c0_15 = arith.constant 0 : index
      %20 = vector.load %arg5[%c0_14, %c0_15] : memref<4x32xf32, #tpu.memory_space<vmem>>, vector<1x32xf32>
      %21 = arith.addf %19, %20 : vector<1x32xf32>
      %cst_16 = arith.constant 0.000000e+00 : f32
      %22 = vector.broadcast %cst_16 : f32 to vector<1x32xf32>
      %23 = arith.maximumf %21, %22 : vector<1x32xf32>
      %c0_17 = arith.constant 0 : index
      %c0_18 = arith.constant 0 : index
      %c0_19 = arith.constant 0 : index
      %24 = vector.load %arg6[%c0_17, %c0_18, %c0_19] : memref<1x1x32xf32, #tpu.memory_space<vmem>>, vector<1x1x32xf32>
      %25 = vector.shape_cast %24 : vector<1x1x32xf32> to vector<1x32xf32>
      %26 = vector.shape_cast %23 : vector<1x32xf32> to vector<1x1x32xf32>
      tpu.vector_store %arg6[%c0_17, %c0_18, %c0_19], %26 {strides = array<i32>} : memref<1x1x32xf32, #tpu.memory_space<vmem>>, vector<1x1x32xf32>,
      %c0_20 = arith.constant 0 : index
      %c0_21 = arith.constant 0 : index
      %c0_22 = arith.constant 0 : index
      %27 = vector.load %arg4[%c0_20, %c0_21, %c0_22] : memref<3x32x32xf32, #tpu.memory_space<vmem>>, vector<1x32x32xf32>
      %28 = vector.shape_cast %27 : vector<1x32x32xf32> to vector<32x32xf32>
      %cst_23 = arith.constant dense<0.000000e+00> : vector<1x32xf32>
      %29 = tpu.matmul %23, %28, %cst_23 {dimension_numbers = #tpu.dot_dimension_numbers<[1], [0], [0], [1], [0, 0, 1, 1], [], []>} : vector<1x32xf32>, vector<32x32xf32>, vector<1x32xf32> -> vector<1x32xf32>
      %c1 = arith.constant 1 : index
      %c0_24 = arith.constant 0 : index
      %30 = vector.load %arg5[%c1, %c0_24] : memref<4x32xf32, #tpu.memory_space<vmem>>, vector<1x32xf32>
      %31 = arith.addf %29, %30 : vector<1x32xf32>
      %cst_25 = arith.constant 0.000000e+00 : f32
      %32 = vector.broadcast %cst_25 : f32 to vector<1x32xf32>
      %33 = arith.maximumf %31, %32 : vector<1x32xf32>
      %c1_26 = arith.constant 1 : index
      %c0_27 = arith.constant 0 : index
      %c0_28 = arith.constant 0 : index
      %34 = vector.load %arg4[%c1_26, %c0_27, %c0_28] : memref<3x32x32xf32, #tpu.memory_space<vmem>>, vector<1x32x32xf32>
      %35 = vector.shape_cast %34 : vector<1x32x32xf32> to vector<32x32xf32>
      %cst_29 = arith.constant dense<0.000000e+00> : vector<1x32xf32>
      %36 = tpu.matmul %33, %35, %cst_29 {dimension_numbers = #tpu.dot_dimension_numbers<[1], [0], [0], [1], [0, 0, 1, 1], [], []>} : vector<1x32xf32>, vector<32x32xf32>, vector<1x32xf32> -> vector<1x32xf32>
      %c2 = arith.constant 2 : index
      %c0_30 = arith.constant 0 : index
      %37 = vector.load %arg5[%c2, %c0_30] : memref<4x32xf32, #tpu.memory_space<vmem>>, vector<1x32xf32>
      %38 = arith.addf %36, %37 : vector<1x32xf32>
      %cst_31 = arith.constant 0.000000e+00 : f32
      %39 = vector.broadcast %cst_31 : f32 to vector<1x32xf32>
      %40 = arith.maximumf %38, %39 : vector<1x32xf32>
      %c2_32 = arith.constant 2 : index
      %c0_33 = arith.constant 0 : index
      %c0_34 = arith.constant 0 : index
      %41 = vector.load %arg4[%c2_32, %c0_33, %c0_34] : memref<3x32x32xf32, #tpu.memory_space<vmem>>, vector<1x32x32xf32>
      %42 = vector.shape_cast %41 : vector<1x32x32xf32> to vector<32x32xf32>
      %cst_35 = arith.constant dense<0.000000e+00> : vector<1x32xf32>
      %43 = tpu.matmul %40, %42, %cst_35 {dimension_numbers = #tpu.dot_dimension_numbers<[1], [0], [0], [1], [0, 0, 1, 1], [], []>} : vector<1x32xf32>, vector<32x32xf32>, vector<1x32xf32> -> vector<1x32xf32>
      %c3 = arith.constant 3 : index
      %c0_36 = arith.constant 0 : index
      %44 = vector.load %arg5[%c3, %c0_36] : memref<4x32xf32, #tpu.memory_space<vmem>>, vector<1x32xf32>
      %45 = arith.addf %43, %44 : vector<1x32xf32>
      %c0_37 = arith.constant 0 : index
      %c0_38 = arith.constant 0 : index
      %c0_39 = arith.constant 0 : index
      %46 = vector.load %arg7[%c0_37, %c0_38, %c0_39] : memref<1x1x32xf32, #tpu.memory_space<vmem>>, vector<1x1x32xf32>
      %47 = vector.shape_cast %46 : vector<1x1x32xf32> to vector<1x32xf32>
      %48 = vector.shape_cast %45 : vector<1x32xf32> to vector<1x1x32xf32>
      tpu.vector_store %arg7[%c0_37, %c0_38, %c0_39], %48 {strides = array<i32>} : memref<1x1x32xf32, #tpu.memory_space<vmem>>, vector<1x1x32xf32>,
    } else {
    }
    return
  }
  func.func @transform_0(%arg0: i32, %arg1: i32) -> (i32, i32, i32) {
    %c0_i32 = arith.constant 0 : i32
    %c0_i32_0 = arith.constant 0 : i32
    return %arg0, %c0_i32, %arg1 : i32, i32, i32
  }
  func.func @transform_1(%arg0: i32, %arg1: i32) -> (i32, i32) {
    %c0_i32 = arith.constant 0 : i32
    %c0_i32_0 = arith.constant 0 : i32
    %c0_i32_1 = arith.constant 0 : i32
    return %c0_i32, %c0_i32_0 : i32, i32
  }
  func.func @transform_2(%arg0: i32, %arg1: i32) -> (i32, i32, i32) {
    %c0_i32 = arith.constant 0 : i32
    %c0_i32_0 = arith.constant 0 : i32
    %c0_i32_1 = arith.constant 0 : i32
    %c0_i32_2 = arith.constant 0 : i32
    return %c0_i32, %c0_i32_0, %c0_i32_1 : i32, i32, i32
  }
  func.func @transform_3(%arg0: i32, %arg1: i32) -> (i32, i32) {
    %c0_i32 = arith.constant 0 : i32
    %c0_i32_0 = arith.constant 0 : i32
    %c0_i32_1 = arith.constant 0 : i32
    return %c0_i32, %c0_i32_0 : i32, i32
  }
  func.func @transform_4(%arg0: i32, %arg1: i32) -> (i32, i32, i32) {
    %c0_i32 = arith.constant 0 : i32
    %c0_i32_0 = arith.constant 0 : i32
    %c0_i32_1 = arith.constant 0 : i32
    return %arg0, %c0_i32, %c0_i32_0 : i32, i32, i32
  }
  func.func @transform_5(%arg0: i32, %arg1: i32) -> (i32, i32, i32) {
    %c0_i32 = arith.constant 0 : i32
    %c0_i32_0 = arith.constant 0 : i32
    %c0_i32_1 = arith.constant 0 : i32
    return %arg0, %c0_i32, %c0_i32_0 : i32, i32, i32
  }
}

</mosaic_0001>

<llo_original>
// kernel: _forward_impl.1
$region0: #{_forward_impl.1}
  #allocation0 [shape = 'u32[]', space=smem, size = 0x4, offset = 0x4, fixed_abs, tag = 'smem constant byte address 0x4 - core index']
  #allocation1 [shape = 'u32[144,128]{1,0:T(1,128)}', space=vmem, size = 0x12000, scoped, tag = 'internal scratch']
  #allocation2 [shape = 'f32[32,128]{1,0:T(8,128)}', space=vmem, size = 0x4000, scoped, tag = 'scratch operand']
  %s0 = inlined_call_operand.vmem [shape: f32[2,4,256], index: 0, kind: input, shape index: {}]
  %s1 = inlined_call_operand.vmem [shape: f32[32,4], index: 1, kind: input, shape index: {}]
  %s2 = inlined_call_operand.vmem [shape: f32[3,32,32], index: 2, kind: input, shape index: {}]
  %s3 = inlined_call_operand.vmem [shape: f32[4,32], index: 3, kind: input, shape index: {}]
  %s4 = inlined_call_operand.hbm [shape: f32[2,1,32], index: 4, kind: output, shape index: {0}]
  %s5 = inlined_call_operand.vmem [shape: f32[2,1,32], index: 5, kind: output, shape index: {1}]
  %6 = xla_tuple %s4, %s5
  %s7 = sld [smem:[#allocation0]]
  $region65: #{_forward_impl.1} parent=0
    _
  %s9 = ssub.s32 1, %s7
  %s10 = scalar_select 0, %s9, %s7
  $region1: #{_forward_impl.1} parent=0
    #allocation3 [shape = 'u8[1024]{0}', space=vmem, size = 0x400, scoped, tag = 'output window, operand 0']
    #allocation4 [shape = 's32[2]{0}', space=sflag, size = 0x8, scoped, tag = 'scoped memory for _forward_impl.1']
    %11 = vsyncpa [#allocation4], 0
    %s12 = scalar_lea.sflag [#allocation4], 1
    %13 = vsyncpa %s12, 0
    loop: start=0, step=1, limit=4
    $region2: #{_forward_impl.1} parent=1 // loop_pre_header
      _
    $region3: #{_forward_impl.1} parent=1 // loop_header
      %s15 = sphi 0, %s19
      %p16 = scmp.ge.s32.totalorder %s15, 4
      %s22 = sphi 0, %s34
      %s23 = sphi 0, %s30
      %s24 = sphi 0, %s22
      %s25 = sphi 0, %s23
      %s26 = sphi 0, %s24
      %s27 = sphi 0, %s25
      %s39 = sphi 0, %s41
      %s42 = sphi 0, %s39
      %s43 = sphi 0, %s42
      %s59 = sphi 0, %s43
      %s63 = sphi 0, %s63
      %s65 = sphi 0, %s63
      %s66 = sphi 0, %s65
      %s80 = sphi 0, %s66
      %s84 = sphi 0, %s84
      %s86 = sphi 0, %s84
      %s87 = sphi 0, %s86
      %s101 = sphi 0, %s87
      %s105 = sphi 0, %s105
      %s107 = sphi 0, %s105
      %s108 = sphi 0, %s107
      %s122 = sphi 0, %s108
      %s128 = sphi 0, %s130
      %s131 = sphi 0, %s128
      %s132 = sphi 0, %s131
      %s148 = sphi 0, %s132
      %s154 = sphi 0, %s156
      %s157 = sphi 0, %s154
      %s158 = sphi 0, %s157
      %s174 = sphi 0, %s158
    $region4: #{_forward_impl.1} parent=1 // loop_header_branch
      %18 = sbr.rel (%p16) target = $region8
    $region5: #{_forward_impl.1} parent=1 // loop_body
      %s20 = ssub.s32 %s15, 1
      %s21 = ssub.s32 %s15, 2
      %s28 = sadd.s32 1, %s23
      %p29 = scmp.ge.s32.totalorder %s28, 1
      %s30 = scalar_select %p29, 0, %s28
      %s31 = sadd.s32 1, %s22
      %s32 = scalar_select %p29, %s31, %s22
      %p33 = scmp.ge.s32.totalorder %s32, 2
      %s34 = scalar_select %p33, 0, %s32
      %s35 = ssub.s32 %s22, %s34
      %s36 = ssub.s32 %s23, %s30
      %s37 = sor.u32 %s35, %s36
      %p38 = scmp.eq.s32.totalorder %s37, 0
      %s40 = sadd.s32 %s39, 1
      %s41 = scalar_select %p38, %s39, %s40
      %p44 = pneg %p38
      %p45 = scmp.eq.s32.totalorder %s15, 1
      %p46 = por %p44, %p45
      %p47 = scmp.ne.s32.totalorder %s39, %s42
      %p48 = scmp.eq.s32.totalorder %s15, 0
      %p49 = por %p47, %p48
      %p50 = scmp.ne.s32.totalorder %s39, %s42
      %p51 = scmp.eq.s32.totalorder %s20, 1
      %p52 = por %p50, %p51
      %p53 = scmp.ne.s32.totalorder %s42, %s43
      %p54 = scmp.eq.s32.totalorder %s20, 0
      %p55 = por %p53, %p54
      %p56 = scmp.ne.s32.totalorder %s42, %s43
      %p57 = scmp.eq.s32.totalorder %s21, 1
      %p58 = por %p56, %p57
      %p60 = scmp.ne.s32.totalorder %s43, %s59
      %p61 = scmp.eq.s32.totalorder %s21, 0
      %p62 = por %p60, %p61
      %s64 = sadd.s32 %s63, 1
      %p67 = scmp.eq.s32.totalorder %s15, 1
      %p68 = scmp.ne.s32.totalorder %s63, %s65
      %p69 = scmp.eq.s32.totalorder %s15, 0
      %p70 = por %p68, %p69
      %p71 = scmp.ne.s32.totalorder %s63, %s65
      %p72 = scmp.eq.s32.totalorder %s20, 1
      %p73 = por %p71, %p72
      %p74 = scmp.ne.s32.totalorder %s65, %s66
      %p75 = scmp.eq.s32.totalorder %s20, 0
      %p76 = por %p74, %p75
      %p77 = scmp.ne.s32.totalorder %s65, %s66
      %p78 = scmp.eq.s32.totalorder %s21, 1
      %p79 = por %p77, %p78
      %p81 = scmp.ne.s32.totalorder %s66, %s80
      %p82 = scmp.eq.s32.totalorder %s21, 0
      %p83 = por %p81, %p82
      %s85 = sadd.s32 %s84, 1
      %p88 = scmp.eq.s32.totalorder %s15, 1
      %p89 = scmp.ne.s32.totalorder %s84, %s86
      %p90 = scmp.eq.s32.totalorder %s15, 0
      %p91 = por %p89, %p90
      %p92 = scmp.ne.s32.totalorder %s84, %s86
      %p93 = scmp.eq.s32.totalorder %s20, 1
      %p94 = por %p92, %p93
      %p95 = scmp.ne.s32.totalorder %s86, %s87
      %p96 = scmp.eq.s32.totalorder %s20, 0
      %p97 = por %p95, %p96
      %p98 = scmp.ne.s32.totalorder %s86, %s87
      %p99 = scmp.eq.s32.totalorder %s21, 1
      %p100 = por %p98, %p99
      %p102 = scmp.ne.s32.totalorder %s87, %s101
      %p103 = scmp.eq.s32.totalorder %s21, 0
      %p104 = por %p102, %p103
      %s106 = sadd.s32 %s105, 1
      %p109 = scmp.eq.s32.totalorder %s15, 1
      %p110 = scmp.ne.s32.totalorder %s105, %s107
      %p111 = scmp.eq.s32.totalorder %s15, 0
      %p112 = por %p110, %p111
      %p113 = scmp.ne.s32.totalorder %s105, %s107
      %p114 = scmp.eq.s32.totalorder %s20, 1
      %p115 = por %p113, %p114
      %p116 = scmp.ne.s32.totalorder %s107, %s108
      %p117 = scmp.eq.s32.totalorder %s20, 0
      %p118 = por %p116, %p117
      %p119 = scmp.ne.s32.totalorder %s107, %s108
      %p120 = scmp.eq.s32.totalorder %s21, 1
      %p121 = por %p119, %p120
      %p123 = scmp.ne.s32.totalorder %s108, %s122
      %p124 = scmp.eq.s32.totalorder %s21, 0
      %p125 = por %p123, %p124
      %s126 = ssub.s32 %s22, %s34
      %p127 = scmp.eq.s32.totalorder %s126, 0
      %s129 = sadd.s32 %s128, 1
      %s130 = scalar_select %p127, %s128, %s129
      %p133 = pneg %p127
      %p134 = scmp.eq.s32.totalorder %s15, 1
      %p135 = por %p133, %p134
      %p136 = scmp.ne.s32.totalorder %s128, %s131
      %p137 = scmp.eq.s32.totalorder %s15, 0
      %p138 = por %p136, %p137
      %p139 = scmp.ne.s32.totalorder %s128, %s131
      %p140 = scmp.eq.s32.totalorder %s20, 1
      %p141 = por %p139, %p140
      %p142 = scmp.ne.s32.totalorder %s131, %s132
      %p143 = scmp.eq.s32.totalorder %s20, 0
      %p144 = por %p142, %p143
      %p145 = scmp.ne.s32.totalorder %s131, %s132
      %p146 = scmp.eq.s32.totalorder %s21, 1
      %p147 = por %p145, %p146
      %p149 = scmp.ne.s32.totalorder %s132, %s148
      %p150 = scmp.eq.s32.totalorder %s21, 0
      %p151 = por %p149, %p150
      %s152 = ssub.s32 %s22, %s34
      %p153 = scmp.eq.s32.totalorder %s152, 0
      %s155 = sadd.s32 %s154, 1
      %s156 = scalar_select %p153, %s154, %s155
      %p159 = pneg %p153
      %p160 = scmp.eq.s32.totalorder %s15, 1
      %p161 = por %p159, %p160
      %p162 = scmp.ne.s32.totalorder %s154, %s157
      %p163 = scmp.eq.s32.totalorder %s15, 0
      %p164 = por %p162, %p163
      %p165 = scmp.ne.s32.totalorder %s154, %s157
      %p166 = scmp.eq.s32.totalorder %s20, 1
      %p167 = por %p165, %p166
      %p168 = scmp.ne.s32.totalorder %s157, %s158
      %p169 = scmp.eq.s32.totalorder %s20, 0
      %p170 = por %p168, %p169
      %p171 = scmp.ne.s32.totalorder %s157, %s158
      %p172 = scmp.eq.s32.totalorder %s21, 1
      %p173 = por %p171, %p172
      %p175 = scmp.ne.s32.totalorder %s158, %s174
      %p176 = scmp.eq.s32.totalorder %s21, 0
      %p177 = por %p175, %p176
      %p178 = scmp.le.s32.totalorder 1, %s15
      %p179 = scmp.lt.s32.totalorder %s15, 3
      %p180 = pnand %p178, %p179
      %p181 = pneg %p180
      // Predicated region
      $region9: #{_forward_impl.1} parent=5 // pred_check
        _
      $region10: #{_forward_impl.1} parent=5 // pred_check_branch
        %183 = sbr.rel (%p180) target = $region12
      $region11: #{_forward_impl.1} parent=5 // pred_region
        %s184 = ssub.s32 %s15, 1
        // Predicated region
        $region13: #{_forward_impl.1} parent=11 // pred_check
          %p185 = pneg %p76
        $region14: #{_forward_impl.1} parent=11 // pred_check_branch
          %187 = sbr.rel (%p185) target = $region16
        $region15: #{_forward_impl.1} parent=11 // pred_region
          _
        $region16: #{_forward_impl.1} parent=11 // pred_fallthru
          _
        // Predicated region
        $region17: #{_forward_impl.1} parent=11 // pred_check
          %p188 = pneg %p97
        $region18: #{_forward_impl.1} parent=11 // pred_check_branch
          %190 = sbr.rel (%p188) target = $region20
        $region19: #{_forward_impl.1} parent=11 // pred_region
          _
        $region20: #{_forward_impl.1} parent=11 // pred_fallthru
          _
        // Predicated region
        $region21: #{_forward_impl.1} parent=11 // pred_check
          %p191 = pneg %p118
        $region22: #{_forward_impl.1} parent=11 // pred_check_branch
          %193 = sbr.rel (%p191) target = $region24
        $region23: #{_forward_impl.1} parent=11 // pred_region
          _
        $region24: #{_forward_impl.1} parent=11 // pred_fallthru
          _
      $region12: #{_forward_impl.1} parent=5 // pred_fallthru
        _
      %p194 = scmp.lt.s32.totalorder %s15, 2
      // Predicated region
      $region25: #{_forward_impl.1} parent=5 // pred_check
        %p195 = pneg %p194
      $region26: #{_forward_impl.1} parent=5 // pred_check_branch
        %197 = sbr.rel (%p195) target = $region28
      $region27: #{_forward_impl.1} parent=5 // pred_region
        // Predicated region
        $region29: #{_forward_impl.1} parent=27 // pred_check
          %p198 = pneg %p49
        $region30: #{_forward_impl.1} parent=27 // pred_check_branch
          %200 = sbr.rel (%p198) target = $region32
        $region31: #{_forward_impl.1} parent=27 // pred_region
          %s201 = smul.u32 2, %s23
          %p202 = scmp.lt.s32.totalorder %s22, 1
          %s203 = scalar_select %p202, %s22, 1
          %p204 = scmp.lt.s32.totalorder %s201, 1
          %s205 = scalar_select %p204, %s201, 1
          %s206 = smul.addr %s203, 2
          %s207 = sadd.s32 %s205, %s206
          %s208 = smul.addr %s207, 4
          %s209 = scalar_lea.vmem %s0, %s208
          %s210 = smul.u32 2, %s23
        $region32: #{_forward_impl.1} parent=27 // pred_fallthru
          _
      $region28: #{_forward_impl.1} parent=5 // pred_fallthru
        _
      %p211 = scmp.le.s32.totalorder 1, %s15
      %p212 = scmp.lt.s32.totalorder %s15, 3
      %p213 = pnand %p211, %p212
      %p214 = pneg %p213
      // Predicated region
      $region33: #{_forward_impl.1} parent=5 // pred_check
        _
      $region34: #{_forward_impl.1} parent=5 // pred_check_branch
        %216 = sbr.rel (%p213) target = $region36
      $region35: #{_forward_impl.1} parent=5 // pred_region
        %s217 = ssub.s32 %s15, 1
        %s218 = smul.u32 2, %s25
        %p219 = scmp.lt.s32.totalorder %s24, 1
        %s220 = scalar_select %p219, %s24, 1
        %p221 = scmp.lt.s32.totalorder %s218, 1
        %s222 = scalar_select %p221, %s218, 1
        %s223 = smul.addr %s220, 2
        %s224 = sadd.s32 %s222, %s223
        %s225 = smul.addr %s224, 4
        %s226 = scalar_lea.vmem %s0, %s225
        %p227 = pneg %p55
        %p228 = pneg %p52
        %p229 = pneg %p76
        %p230 = pneg %p73
        %p231 = pneg %p97
        %p232 = pneg %p94
        %p233 = pneg %p118
        %p234 = pneg %p115
        %p235 = pneg %p144
        %p236 = pneg %p141
        %s237 = sand.u32 %s131, 1
        %s238 = scalar_lea.sflag [#allocation4], %s237
        %s239 = sand.u32 %s131, 1
        %s240 = scalar_lea.vmem [#allocation3], %s239
        %p241 = pneg %p170
        %p242 = pneg %p167
        %p243 = scmp.lt.s32.totalorder %s24, 1
        %s244 = scalar_select %p243, %s24, 1
        %s245 = scalar_lea.vmem %s5, %s244
        %s246 = smul.u32 2, %s25
        %p247 = scmp.lt.s32.totalorder %s24, 1
        %s248 = scalar_select %p247, %s24, 1
        %p249 = scmp.lt.s32.totalorder %s246, 1
        %s250 = scalar_select %p249, %s246, 1
        %s251 = smul.addr %s248, 2
        %s252 = sadd.s32 %s250, %s251
        %s253 = smul.addr %s252, 4
        %s254 = scalar_lea.vmem %s0, %s253
        %s255 = smul.u32 2, %s25
        %p256 = scmp.lt.s32.totalorder %s24, 1
        %s257 = scalar_select %p256, %s24, 1
        %s258 = scalar_lea.vmem %s5, %s257
        %p259 = scmp.eq.s32.totalorder %s25, 0
        // Predicated region
        $region37: #{_forward_impl.1} parent=35 // pred_check
          %p260 = pneg %p259
        $region38: #{_forward_impl.1} parent=35 // pred_check_branch
          %262 = sbr.rel (%p260) target = $region40
        $region39: #{_forward_impl.1} parent=35 // pred_region
          %263 = vst [vmem:[#allocation2] sm:$0xff] -inf
          %264 = vst [vmem:[#allocation2 + $0x8] sm:$0xff] -inf
          %265 = vst [vmem:[#allocation2 + $0x10] sm:$0xff] -inf
          %266 = vst [vmem:[#allocation2 + $0x18] sm:$0xff] -inf
        $region40: #{_forward_impl.1} parent=35 // pred_fallthru
          _
        %v267 = vld [vmem:[%s1] sm:$0xff]
        %v268 = vld [vmem:[%s1 + $0x8] sm:$0xff]
        %v269 = vld [vmem:[%s1 + $0x10] sm:$0xff]
        %v270 = vld [vmem:[%s1 + $0x18] sm:$0xff]
        %v271 = vld [vmem:[#allocation2] sm:$0xff]
        %v272 = vld [vmem:[#allocation2 + $0x8] sm:$0xff]
        %v273 = vld [vmem:[#allocation2 + $0x10] sm:$0xff]
        %v274 = vld [vmem:[#allocation2 + $0x18] sm:$0xff]
        %v275 = vld [vmem:[%s254] sm:$0xff]
        %v277 = vcombine.high %v275, %v275
        %vm278 = vcmask 31744
        %v280 = vsel %vm278, %v267, 0
        %v283 = vsel %vm278, %v268, 0
        %v286 = vsel %vm278, %v269, 0
        %v289 = vsel %vm278, %v270, 0
        %vm291 = vcmask 1043456
        %v292 = vsel %vm291, %v275, 0
        %v294 = vsel %vm291, %v277, 0
        %296 = vmatprep.subr.mxu0 %v294
        %297 = vmatpush1.msra.mxu0 %v292
        %298 = vmatprep.subr.mxu0 0.0
        %299 = vmatpush1.msra.mxu0 0.0
        %300 = vmatprep.subr.mxu0 0.0
        %301 = vmatpush1.msra.mxu0 0.0
        %302 = vmatprep.subr.mxu0 0.0
        %303 = vmatpush1.msra.mxu0 0.0
        %304 = vmatprep.subr.mxu0 0.0
        %305 = vmatpush1.msra.mxu0 0.0
        %306 = vmatprep.subr.mxu0 0.0
        %307 = vmatpush1.msra.mxu0 0.0
        %308 = vmatprep.subr.mxu0 0.0
        %309 = vmatpush1.msra.mxu0 0.0
        %310 = vmatprep.subr.mxu0 0.0
        %311 = vmatpush1.msra.mxu0 0.0
        %312 = vmatprep.subr.mxu0 0.0
        %313 = vmatpush1.msra.mxu0 0.0
        %314 = vmatprep.subr.mxu0 0.0
        %315 = vmatpush1.msra.mxu0 0.0
        %316 = vmatprep.subr.mxu0 0.0
        %317 = vmatpush1.msra.mxu0 0.0
        %318 = vmatprep.subr.mxu0 0.0
        %319 = vmatpush1.msra.mxu0 0.0
        %320 = vmatprep.subr.mxu0 0.0
        %321 = vmatpush1.msra.mxu0 0.0
        %322 = vmatprep.subr.mxu0 0.0
        %323 = vmatpush1.msra.mxu0 0.0
        %324 = vmatprep.subr.mxu0 0.0
        %325 = vmatpush1.msra.mxu0 0.0
        %326 = vmatprep.subr.mxu0 0.0
        %327 = vmatpush1.msra.mxu0 0.0
        %328 = vmatprep.subr.mxu0 0.0
        %329 = vmatpush1.msra.mxu0 0.0
        %330 = vmatprep.subr.mxu0 0.0
        %331 = vmatpush1.msra.mxu0 0.0
        %332 = vmatprep.subr.mxu0 0.0
        %333 = vmatpush1.msra.mxu0 0.0
        %334 = vmatprep.subr.mxu0 0.0
        %335 = vmatpush1.msra.mxu0 0.0
        %336 = vmatprep.subr.mxu0 0.0
        %337 = vmatpush1.msra.mxu0 0.0
        %338 = vmatprep.subr.mxu0 0.0
        %339 = vmatpush1.msra.mxu0 0.0
        %340 = vmatprep.subr.mxu0 0.0
        %341 = vmatpush1.msra.mxu0 0.0
        %342 = vmatprep.subr.mxu0 0.0
        %343 = vmatpush1.msra.mxu0 0.0
        %344 = vmatprep.subr.mxu0 0.0
        %345 = vmatpush1.msra.mxu0 0.0
        %346 = vmatprep.subr.mxu0 0.0
        %347 = vmatpush1.msra.mxu0 0.0
        %348 = vmatprep.subr.mxu0 0.0
        %349 = vmatpush1.msra.mxu0 0.0
        %350 = vmatprep.subr.mxu0 0.0
        %351 = vmatpush1.msra.mxu0 0.0
        %352 = vmatprep.subr.mxu0 0.0
        %353 = vmatpush1.msra.mxu0 0.0
        %354 = vmatprep.subr.mxu0 0.0
        %355 = vmatpush1.msra.mxu0 0.0
        %356 = vmatprep.subr.mxu0 0.0
        %357 = vmatpush1.msra.mxu0 0.0
        %358 = vmatprep.subr.mxu0 0.0
        %359 = vmatpush1.msra.mxu0 0.0
        %360 = vmatprep.mubr.f32.mxu0 0.0
        %361 = vmatmul.mubr.f32.gmra.mrb[0].mxu0 %v280
        %v362 = vpop.f32.mrb[0].mxu0
        %v363 = vadd.f32 0.0, %v362
        %v364 = vpop.f32.mrb[0].mxu0
        %v365 = vadd.f32 0.0, %v364
        %366 = vmatprep.mubr.f32.mxu0 0.0
        %367 = vmatmul.mubr.f32.gmra.mrb[0].mxu0 %v283
        %v368 = vpop.f32.mrb[0].mxu0
        %v369 = vadd.f32 0.0, %v368
        %v370 = vpop.f32.mrb[0].mxu0
        %v371 = vadd.f32 0.0, %v370
        %372 = vmatprep.mubr.f32.mxu0 0.0
        %373 = vmatmul.mubr.f32.gmra.mrb[0].mxu0 %v286
        %v374 = vpop.f32.mrb[0].mxu0
        %v375 = vadd.f32 0.0, %v374
        %v376 = vpop.f32.mrb[0].mxu0
        %v377 = vadd.f32 0.0, %v376
        %378 = vmatprep.mubr.f32.mxu0 0.0
        %379 = vmatmul.mubr.f32.gmra.mrb[0].mxu0 %v289
        %v380 = vpop.f32.mrb[0].mxu0
        %v381 = vadd.f32 0.0, %v380
        %v382 = vpop.f32.mrb[0].mxu0
        %v383 = vadd.f32 0.0, %v382
        %384 = vdwg.mxu0
        %v385 = vmax.f32 %v271, %v363
        %v386 = vmax.f32 %v272, %v369
        %v387 = vmax.f32 %v273, %v375
        %v388 = vmax.f32 %v274, %v381
        %v389 = vmax.f32 %v385, %v365
        %v390 = vmax.f32 %v386, %v371
        %v391 = vmax.f32 %v387, %v377
        %v392 = vmax.f32 %v388, %v383
        %393 = vst [vmem:[#allocation2] sm:$0xff] %v389
        %394 = vst [vmem:[#allocation2 + $0x8] sm:$0xff] %v390
        %395 = vst [vmem:[#allocation2 + $0x10] sm:$0xff] %v391
        %396 = vst [vmem:[#allocation2 + $0x18] sm:$0xff] %v392
        // Predicated region
        $region41: #{_forward_impl.1} parent=35 // pred_check
          %p397 = pneg %p259
        $region42: #{_forward_impl.1} parent=35 // pred_check_branch
          %399 = sbr.rel (%p397) target = $region44
        $region43: #{_forward_impl.1} parent=35 // pred_region
          %v400 = vld [vmem:[#allocation2] sm:$0xff]
          %v401 = vld [vmem:[#allocation2 + $0x8] sm:$0xff]
          %v402 = vld [vmem:[#allocation2 + $0x10] sm:$0xff]
          %v403 = vld [vmem:[#allocation2 + $0x18] sm:$0xff]
          %404 = vxpose.xlu0.b32.start [1/16] %v400, 128
          %405 = vxpose.xlu0.b32.cont [2/16] %v401, 128
          %406 = vxpose.xlu0.b32.cont [3/16] %v402, 128
          %407 = vxpose.xlu0.b32.cont [4/16] %v403, 128
          %408 = vxpose.xlu0.b32.cont [5/16] 0.0, 128
          %409 = vxpose.xlu0.b32.cont [6/16] 0.0, 128
          %410 = vxpose.xlu0.b32.cont [7/16] 0.0, 128
          %411 = vxpose.xlu0.b32.cont [8/16] 0.0, 128
          %412 = vxpose.xlu0.b32.cont [9/16] 0.0, 128
          %413 = vxpose.xlu0.b32.cont [10/16] 0.0, 128
          %414 = vxpose.xlu0.b32.cont [11/16] 0.0, 128
          %415 = vxpose.xlu0.b32.cont [12/16] 0.0, 128
          %416 = vxpose.xlu0.b32.cont [13/16] 0.0, 128
          %417 = vxpose.xlu0.b32.cont [14/16] 0.0, 128
          %418 = vxpose.xlu0.b32.cont [15/16] 0.0, 128
          %419 = vxpose.xlu0.b32.end [16/16] 0.0, 128
          %v420 = vpop.trf.xlu0
          %v421 = vpop.trf.xlu0
          %v422 = vpop.trf.xlu0
          %v423 = vpop.trf.xlu0
          %v424 = vpop.trf.xlu0
          %v425 = vpop.trf.xlu0
          %v426 = vpop.trf.xlu0
          %v427 = vpop.trf.xlu0
          %v428 = vpop.trf.xlu0
          %v429 = vpop.trf.xlu0
          %v430 = vpop.trf.xlu0
          %v431 = vpop.trf.xlu0
          %v432 = vpop.trf.xlu0
          %v433 = vpop.trf.xlu0
          %v434 = vpop.trf.xlu0
          %v435 = vpop.trf.xlu0
          %vm436 = vcmask 261120
          %v437 = vsel %vm436, %v420, -inf
          %v438 = vsel %vm436, %v421, -inf
          %v439 = vsel %vm436, %v422, -inf
          %v440 = vsel %vm436, %v423, -inf
          %v441 = vsel %vm436, %v424, -inf
          %v442 = vmax.f32 %v437, %v441
          %v443 = vsel %vm436, %v425, -inf
          %v444 = vmax.f32 %v438, %v443
          %v445 = vsel %vm436, %v426, -inf
          %v446 = vmax.f32 %v439, %v445
          %v447 = vsel %vm436, %v427, -inf
          %v448 = vmax.f32 %v440, %v447
          %v449 = vsel %vm436, %v428, -inf
          %v450 = vmax.f32 %v442, %v449
          %v451 = vsel %vm436, %v429, -inf
          %v452 = vmax.f32 %v444, %v451
          %v453 = vsel %vm436, %v430, -inf
          %v454 = vmax.f32 %v446, %v453
          %v455 = vsel %vm436, %v431, -inf
          %v456 = vmax.f32 %v448, %v455
          %v457 = vsel %vm436, %v432, -inf
          %v458 = vmax.f32 %v450, %v457
          %v459 = vsel %vm436, %v433, -inf
          %v460 = vmax.f32 %v452, %v459
          %v461 = vsel %vm436, %v434, -inf
          %v462 = vmax.f32 %v454, %v461
          %v463 = vsel %vm436, %v435, -inf
          %v464 = vmax.f32 %v456, %v463
          %v465 = vmax.f32 %v458, %v460
          %v466 = vmax.f32 %v462, %v464
          %v467 = vmax.f32 %v465, %v466
          %v468 = vrot.slane %v467, 4
          %v469 = vmax.f32 %v467, %v468
          %v470 = vrot.slane %v469, 2
          %v471 = vmax.f32 %v469, %v470
          %v472 = vrot.slane %v471, 1
          %v473 = vmax.f32 %v471, %v472
          %v474 = vld [vmem:[%s3] sm:$0x1]
          %v475 = vadd.f32 %v473, %v474
          %v476 = vmax.f32 %v475, 0.0
          %vm477 = vcmask 253952
          %478 = vst.msk [vmem:[%s240] sm:$0x1] %vm477, %v476
          %v479 = vld [vmem:[%s2] sm:$0xff]
          %v480 = vld [vmem:[%s2 + $0x8] sm:$0xff]
          %v481 = vld [vmem:[%s2 + $0x10] sm:$0xff]
          %v482 = vld [vmem:[%s2 + $0x18] sm:$0xff]
          %v483 = vld [vmem:[%s3 + $0x1] sm:$0x1]
          %v485 = vsel %vm436, %v476, 0
          %487 = vmatprep.subr.mxu0 0.0
          %488 = vmatpush1.msra.mxu0 %v479
          %489 = vmatprep.subr.mxu0 0.0
          %490 = vmatpush1.msra.mxu0 %v480
          %491 = vmatprep.subr.mxu0 0.0
          %492 = vmatpush1.msra.mxu0 %v481
          %493 = vmatprep.subr.mxu0 0.0
          %494 = vmatpush1.msra.mxu0 %v482
          %495 = vmatprep.subr.mxu0 0.0
          %496 = vmatpush1.msra.mxu0 0.0
          %497 = vmatprep.subr.mxu0 0.0
          %498 = vmatpush1.msra.mxu0 0.0
          %499 = vmatprep.subr.mxu0 0.0
          %500 = vmatpush1.msra.mxu0 0.0
          %501 = vmatprep.subr.mxu0 0.0
          %502 = vmatpush1.msra.mxu0 0.0
          %503 = vmatprep.subr.mxu0 0.0
          %504 = vmatpush1.msra.mxu0 0.0
          %505 = vmatprep.subr.mxu0 0.0
          %506 = vmatpush1.msra.mxu0 0.0
          %507 = vmatprep.subr.mxu0 0.0
          %508 = vmatpush1.msra.mxu0 0.0
          %509 = vmatprep.subr.mxu0 0.0
          %510 = vmatpush1.msra.mxu0 0.0
          %511 = vmatprep.subr.mxu0 0.0
          %512 = vmatpush1.msra.mxu0 0.0
          %513 = vmatprep.subr.mxu0 0.0
          %514 = vmatpush1.msra.mxu0 0.0
          %515 = vmatprep.subr.mxu0 0.0
          %516 = vmatpush1.msra.mxu0 0.0
          %517 = vmatprep.subr.mxu0 0.0
          %518 = vmatpush1.msra.mxu0 0.0
          %519 = vmatprep.subr.mxu0 0.0
          %520 = vmatpush1.msra.mxu0 0.0
          %521 = vmatprep.subr.mxu0 0.0
          %522 = vmatpush1.msra.mxu0 0.0
          %523 = vmatprep.subr.mxu0 0.0
          %524 = vmatpush1.msra.mxu0 0.0
          %525 = vmatprep.subr.mxu0 0.0
          %526 = vmatpush1.msra.mxu0 0.0
          %527 = vmatprep.subr.mxu0 0.0
          %528 = vmatpush1.msra.mxu0 0.0
          %529 = vmatprep.subr.mxu0 0.0
          %530 = vmatpush1.msra.mxu0 0.0
          %531 = vmatprep.subr.mxu0 0.0
          %532 = vmatpush1.msra.mxu0 0.0
          %533 = vmatprep.subr.mxu0 0.0
          %534 = vmatpush1.msra.mxu0 0.0
          %535 = vmatprep.subr.mxu0 0.0
          %536 = vmatpush1.msra.mxu0 0.0
          %537 = vmatprep.subr.mxu0 0.0
          %538 = vmatpush1.msra.mxu0 0.0
          %539 = vmatprep.subr.mxu0 0.0
          %540 = vmatpush1.msra.mxu0 0.0
          %541 = vmatprep.subr.mxu0 0.0
          %542 = vmatpush1.msra.mxu0 0.0
          %543 = vmatprep.subr.mxu0 0.0
          %544 = vmatpush1.msra.mxu0 0.0
          %545 = vmatprep.subr.mxu0 0.0
          %546 = vmatpush1.msra.mxu0 0.0
          %547 = vmatprep.subr.mxu0 0.0
          %548 = vmatpush1.msra.mxu0 0.0
          %549 = vmatprep.subr.mxu0 0.0
          %550 = vmatpush1.msra.mxu0 0.0
          %551 = vmatprep.mubr.f32.mxu0 0.0
          %552 = vmatmul.mubr.f32.gmra.mrb[0].mxu0 %v485
          %v553 = vpop.f32.mrb[0].mxu0
          %v554 = vadd.f32 %v483, %v553
          %v555 = vpop.f32.mrb[0].mxu0
          %556 = vdwg.mxu0
          %v557 = vmax.f32 %v554, 0.0
          %s558 = scalar_lea.vmem %s2, 32
          %v559 = vld [vmem:[%s558] sm:$0xff]
          %v560 = vld [vmem:[%s558 + $0x8] sm:$0xff]
          %v561 = vld [vmem:[%s558 + $0x10] sm:$0xff]
          %v562 = vld [vmem:[%s558 + $0x18] sm:$0xff]
          %v563 = vld [vmem:[%s3 + $0x2] sm:$0x1]
          %v565 = vsel %vm436, %v557, 0
          %567 = vmatprep.subr.mxu0 0.0
          %568 = vmatpush1.msra.mxu0 %v559
          %569 = vmatprep.subr.mxu0 0.0
          %570 = vmatpush1.msra.mxu0 %v560
          %571 = vmatprep.subr.mxu0 0.0
          %572 = vmatpush1.msra.mxu0 %v561
          %573 = vmatprep.subr.mxu0 0.0
          %574 = vmatpush1.msra.mxu0 %v562
          %575 = vmatprep.subr.mxu0 0.0
          %576 = vmatpush1.msra.mxu0 0.0
          %577 = vmatprep.subr.mxu0 0.0
          %578 = vmatpush1.msra.mxu0 0.0
          %579 = vmatprep.subr.mxu0 0.0
          %580 = vmatpush1.msra.mxu0 0.0
          %581 = vmatprep.subr.mxu0 0.0
          %582 = vmatpush1.msra.mxu0 0.0
          %583 = vmatprep.subr.mxu0 0.0
          %584 = vmatpush1.msra.mxu0 0.0
          %585 = vmatprep.subr.mxu0 0.0
          %586 = vmatpush1.msra.mxu0 0.0
          %587 = vmatprep.subr.mxu0 0.0
          %588 = vmatpush1.msra.mxu0 0.0
          %589 = vmatprep.subr.mxu0 0.0
          %590 = vmatpush1.msra.mxu0 0.0
          %591 = vmatprep.subr.mxu0 0.0
          %592 = vmatpush1.msra.mxu0 0.0
          %593 = vmatprep.subr.mxu0 0.0
          %594 = vmatpush1.msra.mxu0 0.0
          %595 = vmatprep.subr.mxu0 0.0
          %596 = vmatpush1.msra.mxu0 0.0
          %597 = vmatprep.subr.mxu0 0.0
          %598 = vmatpush1.msra.mxu0 0.0
          %599 = vmatprep.subr.mxu0 0.0
          %600 = vmatpush1.msra.mxu0 0.0
          %601 = vmatprep.subr.mxu0 0.0
          %602 = vmatpush1.msra.mxu0 0.0
          %603 = vmatprep.subr.mxu0 0.0
          %604 = vmatpush1.msra.mxu0 0.0
          %605 = vmatprep.subr.mxu0 0.0
          %606 = vmatpush1.msra.mxu0 0.0
          %607 = vmatprep.subr.mxu0 0.0
          %608 = vmatpush1.msra.mxu0 0.0
          %609 = vmatprep.subr.mxu0 0.0
          %610 = vmatpush1.msra.mxu0 0.0
          %611 = vmatprep.subr.mxu0 0.0
          %612 = vmatpush1.msra.mxu0 0.0
          %613 = vmatprep.subr.mxu0 0.0
          %614 = vmatpush1.msra.mxu0 0.0
          %615 = vmatprep.subr.mxu0 0.0
          %616 = vmatpush1.msra.mxu0 0.0
          %617 = vmatprep.subr.mxu0 0.0
          %618 = vmatpush1.msra.mxu0 0.0
          %619 = vmatprep.subr.mxu0 0.0
          %620 = vmatpush1.msra.mxu0 0.0
          %621 = vmatprep.subr.mxu0 0.0
          %622 = vmatpush1.msra.mxu0 0.0
          %623 = vmatprep.subr.mxu0 0.0
          %624 = vmatpush1.msra.mxu0 0.0
          %625 = vmatprep.subr.mxu0 0.0
          %626 = vmatpush1.msra.mxu0 0.0
          %627 = vmatprep.subr.mxu0 0.0
          %628 = vmatpush1.msra.mxu0 0.0
          %629 = vmatprep.subr.mxu0 0.0
          %630 = vmatpush1.msra.mxu0 0.0
          %631 = vmatprep.mubr.f32.mxu0 0.0
          %632 = vmatmul.mubr.f32.gmra.mrb[0].mxu0 %v565
          %v633 = vpop.f32.mrb[0].mxu0
          %v634 = vadd.f32 %v563, %v633
          %v635 = vpop.f32.mrb[0].mxu0
          %636 = vdwg.mxu0
          %v637 = vmax.f32 %v634, 0.0
          %s638 = scalar_lea.vmem %s2, 64
          %v639 = vld [vmem:[%s638] sm:$0xff]
          %v640 = vld [vmem:[%s638 + $0x8] sm:$0xff]
          %v641 = vld [vmem:[%s638 + $0x10] sm:$0xff]
          %v642 = vld [vmem:[%s638 + $0x18] sm:$0xff]
          %v643 = vld [vmem:[%s3 + $0x3] sm:$0x1]
          %v645 = vsel %vm436, %v637, 0
          %647 = vmatprep.subr.mxu0 0.0
          %648 = vmatpush1.msra.mxu0 %v639
          %649 = vmatprep.subr.mxu0 0.0
          %650 = vmatpush1.msra.mxu0 %v640
          %651 = vmatprep.subr.mxu0 0.0
          %652 = vmatpush1.msra.mxu0 %v641
          %653 = vmatprep.subr.mxu0 0.0
          %654 = vmatpush1.msra.mxu0 %v642
          %655 = vmatprep.subr.mxu0 0.0
          %656 = vmatpush1.msra.mxu0 0.0
          %657 = vmatprep.subr.mxu0 0.0
          %658 = vmatpush1.msra.mxu0 0.0
          %659 = vmatprep.subr.mxu0 0.0
          %660 = vmatpush1.msra.mxu0 0.0
          %661 = vmatprep.subr.mxu0 0.0
          %662 = vmatpush1.msra.mxu0 0.0
          %663 = vmatprep.subr.mxu0 0.0
          %664 = vmatpush1.msra.mxu0 0.0
          %665 = vmatprep.subr.mxu0 0.0
          %666 = vmatpush1.msra.mxu0 0.0
          %667 = vmatprep.subr.mxu0 0.0
          %668 = vmatpush1.msra.mxu0 0.0
          %669 = vmatprep.subr.mxu0 0.0
          %670 = vmatpush1.msra.mxu0 0.0
          %671 = vmatprep.subr.mxu0 0.0
          %672 = vmatpush1.msra.mxu0 0.0
          %673 = vmatprep.subr.mxu0 0.0
          %674 = vmatpush1.msra.mxu0 0.0
          %675 = vmatprep.subr.mxu0 0.0
          %676 = vmatpush1.msra.mxu0 0.0
          %677 = vmatprep.subr.mxu0 0.0
          %678 = vmatpush1.msra.mxu0 0.0
          %679 = vmatprep.subr.mxu0 0.0
          %680 = vmatpush1.msra.mxu0 0.0
          %681 = vmatprep.subr.mxu0 0.0
          %682 = vmatpush1.msra.mxu0 0.0
          %683 = vmatprep.subr.mxu0 0.0
          %684 = vmatpush1.msra.mxu0 0.0
          %685 = vmatprep.subr.mxu0 0.0
          %686 = vmatpush1.msra.mxu0 0.0
          %687 = vmatprep.subr.mxu0 0.0
          %688 = vmatpush1.msra.mxu0 0.0
          %689 = vmatprep.subr.mxu0 0.0
          %690 = vmatpush1.msra.mxu0 0.0
          %691 = vmatprep.subr.mxu0 0.0
          %692 = vmatpush1.msra.mxu0 0.0
          %693 = vmatprep.subr.mxu0 0.0
          %694 = vmatpush1.msra.mxu0 0.0
          %695 = vmatprep.subr.mxu0 0.0
          %696 = vmatpush1.msra.mxu0 0.0
          %697 = vmatprep.subr.mxu0 0.0
          %698 = vmatpush1.msra.mxu0 0.0
          %699 = vmatprep.subr.mxu0 0.0
          %700 = vmatpush1.msra.mxu0 0.0
          %701 = vmatprep.subr.mxu0 0.0
          %702 = vmatpush1.msra.mxu0 0.0
          %703 = vmatprep.subr.mxu0 0.0
          %704 = vmatpush1.msra.mxu0 0.0
          %705 = vmatprep.subr.mxu0 0.0
          %706 = vmatpush1.msra.mxu0 0.0
          %707 = vmatprep.subr.mxu0 0.0
          %708 = vmatpush1.msra.mxu0 0.0
          %709 = vmatprep.subr.mxu0 0.0
          %710 = vmatpush1.msra.mxu0 0.0
          %711 = vmatprep.mubr.f32.mxu0 0.0
          %712 = vmatmul.mubr.f32.gmra.mrb[0].mxu0 %v645
          %v713 = vpop.f32.mrb[0].mxu0
          %v714 = vadd.f32 %v643, %v713
          %v715 = vpop.f32.mrb[0].mxu0
          %716 = vdwg.mxu0
          %717 = vst.msk [vmem:[%s258] sm:$0x1] %vm477, %v714
        $region44: #{_forward_impl.1} parent=35 // pred_fallthru
          _
        %s718 = sand.u32 %s131, 1
        %s719 = scalar_lea.sflag [#allocation4], %s718
        %s720 = sand.u32 %s131, 1
        %s721 = scalar_lea.vmem [#allocation3], %s720
        %p722 = scmp.lt.s32.totalorder %s24, 1
        %s723 = scalar_select %p722, %s24, 1
        %s724 = scalar_lea.vmem %s5, %s723
        // Predicated region
        $region45: #{_forward_impl.1} parent=35 // pred_check
          %p725 = pneg %p141
        $region46: #{_forward_impl.1} parent=35 // pred_check_branch
          %727 = sbr.rel (%p725) target = $region48
        $region47: #{_forward_impl.1} parent=35 // pred_region
          %s729 = ssub.s32 16, 16
          %730 = vsyncadd %s719, %s729
          %s731 = smul.addr %s24, 16
          %s732 = scalar_lea.hbm %s4, %s731
          %s734 = sshll.u32 %s721, 4
          %s735 = int_to_ptr.vmem [resolvable:$true] %s734
          %737 = dma.vmem_to_hbm [thread:$0]  %s735, 16, %s732, %s719
        $region48: #{_forward_impl.1} parent=35 // pred_fallthru
          _
        // Predicated region
        $region49: #{_forward_impl.1} parent=35 // pred_check
          %p738 = pneg %p167
        $region50: #{_forward_impl.1} parent=35 // pred_check_branch
          %740 = sbr.rel (%p738) target = $region52
        $region51: #{_forward_impl.1} parent=35 // pred_region
          _
        $region52: #{_forward_impl.1} parent=35 // pred_fallthru
          _
      $region36: #{_forward_impl.1} parent=5 // pred_fallthru
        _
      %p741 = scmp.le.s32.totalorder 2, %s15
      // Predicated region
      $region53: #{_forward_impl.1} parent=5 // pred_check
        %p742 = pneg %p741
      $region54: #{_forward_impl.1} parent=5 // pred_check_branch
        %744 = sbr.rel (%p742) target = $region56
      $region55: #{_forward_impl.1} parent=5 // pred_region
        %s745 = ssub.s32 %s15, 2
        // Predicated region
        $region57: #{_forward_impl.1} parent=55 // pred_check
          %p746 = pneg %p147
        $region58: #{_forward_impl.1} parent=55 // pred_check_branch
          %748 = sbr.rel (%p746) target = $region60
        $region59: #{_forward_impl.1} parent=55 // pred_region
          %s749 = sand.u32 %s132, 1
          %s750 = scalar_lea.sflag [#allocation4], %s749
          %s751 = sand.u32 %s132, 1
          %s752 = scalar_lea.vmem [#allocation3], %s751
          %753 = dma.done %s750, 16
        $region60: #{_forward_impl.1} parent=55 // pred_fallthru
          _
        // Predicated region
        $region61: #{_forward_impl.1} parent=55 // pred_check
          %p754 = pneg %p173
        $region62: #{_forward_impl.1} parent=55 // pred_check_branch
          %756 = sbr.rel (%p754) target = $region64
        $region63: #{_forward_impl.1} parent=55 // pred_region
          %p757 = scmp.lt.s32.totalorder %s26, 1
          %s758 = scalar_select %p757, %s26, 1
          %s759 = scalar_lea.vmem %s5, %s758
        $region64: #{_forward_impl.1} parent=55 // pred_fallthru
          _
      $region56: #{_forward_impl.1} parent=5 // pred_fallthru
        _
    $region6: #{_forward_impl.1} parent=1 // loop_footer
      %s19 = sadd.s32 1, %s15
    $region7: #{_forward_impl.1} parent=1 // loop_footer_branch
      %14 = sbr.rel target = $region3
    $region8: #{_forward_impl.1} parent=1 // loop_exit
      _
    %760 = vsyncpa [#allocation4], 1
    %s761 = scalar_lea.sflag [#allocation4], 1
    %762 = vsyncpa %s761, 1

</llo_original>
